<compile_context>
chip_gen: v5e
topology: v5e:2x2
jax: 0.10.0
libtpu: 0.0.40
codegen_flags: <defaults>
</compile_context>

<pallas_src>
import functools

import numpy as np
import jax
import jax.numpy as jnp
from jax.experimental import pallas as pl
from jax.experimental.pallas import tpu as pltpu


def _round_up(x, m):
    return ((x + m - 1) // m) * m


# ---------------------------------------------------------------------------
# Kernel
# ---------------------------------------------------------------------------
def _encoderx4_kernel(x0_ref, x1_ref, x2_ref, x3_ref, w_ref, b_ref, o_ref, *,
                      pads):
    """Fused (remaining) maxpool + in-kernel channel pad + block-diag 1x1 conv.

    x{i}_ref : (P_i, C_i, TM)  staged branch input (one pool axis already
               reduced by XLA), lane-dense on TM.
    w_ref    : (out_ch, sum C_pad)  block-diagonal fused 1x1-conv weight.
    b_ref    : (out_ch, 1)          fused bias column.
    o_ref    : (out_ch, TM)         transposed output tile (lane-dense store).
    """
    blocks = []
    for ref, pad in zip((x0_ref, x1_ref, x2_ref, x3_ref), pads):
        # Reduce the remaining pool axis (leading axis): pure VPU elementwise
        # max across P_i (C_i, TM) slabs — no cross-lane XLU work.
        p = jnp.max(ref[...], axis=0)                      # (C_i, TM)
        if pad:
            # Pad the *tiny pooled tile* (not the staged HBM tensor) so the
            # sublane concat below stays 8-aligned.  Matching weight columns
            # in w_ref are zero.
            p = jnp.concatenate(
                [p, jnp.zeros((pad, p.shape[1]), p.dtype)], axis=0)
        blocks.append(p)
    pooled = jnp.concatenate(blocks, axis=0)               # (sum C_pad, TM)

    # Single block-diagonal matmul + bias; lane-dense unmasked (out_ch, TM) store.
    o_ref[...] = (jnp.dot(w_ref[...], pooled,
                          preferred_element_type=jnp.float32)
                  + b_ref[...])


# ---------------------------------------------------------------------------
# Wrapper
# ---------------------------------------------------------------------------
def _prep_branch(x, pool):
    """NCHW -> (P, C, M) with M = N*h*w lane-dense on the last axis.

    One pool axis (the contiguous W-window axis) is reduced here so XLA fuses
    it with the read; only a P-deep window remains for the kernel to reduce.
    """
    N, C, H, W = x.shape
    h, w = H // pool, W // pool
    x = x[:, :, :h * pool, :w * pool]        # floor-crop == MaxPool2d(k=stride)
    x = x.reshape(N, C, h, pool, w, pool)
    x = x.max(axis=5)                        # contiguous last-axis reduce (XLA)
    x = x.transpose(3, 1, 0, 2, 4)           # (P, C, N, h, w): dest lane-dense
    x = x.reshape(pool, C, N * h * w)
    return x, (N, h, w)


def _choose_tm(m_pad):
    """M tile: multiple of 128; prefer >= 4 grid steps (2 per v7x core)."""
    for tm in (512, 256, 128):
        if m_pad % tm == 0 and m_pad // tm >= 4:
            return tm
    return 128


def prepare_params(params):
    """Build the fused block-diagonal weight / bias ONCE, outside the jit path.

    params: 'w0'..'w3' of shape (Co_i, Ci, 1, 1), 'b0'..'b3' of shape (Co_i,).
    Returns (w_bd (out_ch, sum C_pad), b_col (out_ch, 1)).
    """
    co = [int(params[f"w{i}"].shape[0]) for i in range(4)]
    c_in = [int(params[f"w{i}"].shape[1]) for i in range(4)]
    c_pad = [_round_up(c, 8) for c in c_in]
    out_ch, c_tot = sum(co), sum(c_pad)

    w_bd = np.zeros((out_ch, c_tot), np.float32)
    row, col = 0, 0
    for i in range(4):
        wi = np.asarray(params[f"w{i}"])[:, :, 0, 0].astype(np.float32)
        w_bd[row:row + co[i], col:col + c_in[i]] = wi
        row += co[i]
        col += c_pad[i]
    b_col = np.concatenate(
        [np.asarray(params[f"b{i}"]).astype(np.float32) for i in range(4)]
    ).reshape(out_ch, 1)
    return jnp.asarray(w_bd), jnp.asarray(b_col)


def encoderx4_forward(x0, x, x1c, x2c, w_bd, b_col):
    pools = (16, 8, 4, 2)
    inputs = (x0, x, x1c, x2c)
    c_in = [int(a.shape[1]) for a in inputs]
    c_pad = [_round_up(c, 8) for c in c_in]
    pads = tuple(cp - c for cp, c in zip(c_pad, c_in))
    out_ch, c_tot = int(w_bd.shape[0]), int(w_bd.shape[1])
    assert c_tot == sum(c_pad), "w_bd columns must match padded channel totals"

    # Stage each branch as (P, C, M): one pool axis pre-reduced, M lane-dense.
    xs, dims = [], None
    for inp, pool in zip(inputs, pools):
        xr, d = _prep_branch(inp, pool)
        xs.append(xr)
        if dims is None:
            dims = d
        else:
            assert dims == d, "all branches must pool to the same spatial size"
    N, h, w = dims
    M = N * h * w

    # Pad M to a multiple of 128 so every store is an unmasked lane-dense vst
    # and the grid always tiles (never a single huge un-pipelined block).
    M_pad = _round_up(M, 128)
    if M_pad > M:
        xs = [jnp.pad(xr, ((0, 0), (0, 0), (0, M_pad - M))) for xr in xs]

    TM = _choose_tm(M_pad)
    grid = (M_pad // TM,)

    kernel = functools.partial(_encoderx4_kernel, pads=pads)

    in_specs = (
        [pl.BlockSpec((int(xr.shape[0]), int(xr.shape[1]), TM),
                      lambda m: (0, 0, m)) for xr in xs]
        + [pl.BlockSpec((out_ch, c_tot), lambda m: (0, 0)),
           pl.BlockSpec((out_ch, 1), lambda m: (0, 0))]
    )
    out_spec = pl.BlockSpec((out_ch, TM), lambda m: (0, m))

    out_t = pl.pallas_call(
        kernel,
        out_shape=jax.ShapeDtypeStruct((out_ch, M_pad), jnp.float32),
        grid=grid,
        in_specs=in_specs,
        out_specs=out_spec,
        compiler_params=pltpu.CompilerParams(
            dimension_semantics=("parallel",)),
    )(*xs, w_bd, b_col)

    # (out_ch, M_pad) -> slice valid M -> (N, out_ch, h, w).
    out_t = out_t[:, :M]
    return out_t.reshape(out_ch, N, h, w).transpose(1, 0, 2, 3)


# ---------------------------------------------------------------------------
# Pure-JAX reference & test harness
# ---------------------------------------------------------------------------
def _ref_forward(x0, x, x1c, x2c, params):
    """Mirrors the PyTorch forward exactly (for validation)."""
    pools = (16, 8, 4, 2)
    outs = []
    for i, (inp, pool) in enumerate(zip((x0, x, x1c, x2c), pools)):
        N, C, H, W = inp.shape
        h, w = H // pool, W // pool
        p = inp[:, :, :h * pool, :w * pool].reshape(
            N, C, h, pool, w, pool).max(axis=(3, 5))
        wmat = params[f"w{i}"][:, :, 0, 0]                       # (Co, Ci)
        b = params[f"b{i}"]
        y = jnp.einsum("nchw,oc->nohw", p, wmat) + b[None, :, None, None]
        outs.append(y)
    return jnp.concatenate(outs, axis=1)


def _make_params(key, in_chs, out_ch):
    """Deterministic synthetic parameters matching the module's __init__ shapes."""
    branch_out = (out_ch // 8, out_ch // 8, out_ch // 4, out_ch // 2)
    params = {}
    keys = jax.random.split(key, 8)
    for i, (ci, cout) in enumerate(zip(in_chs, branch_out)):
        params[f"w{i}"] = 0.1 * jax.random.normal(keys[2 * i], (cout, ci, 1, 1),
                                                  jnp.float32)
        params[f"b{i}"] = 0.1 * jax.random.normal(keys[2 * i + 1], (cout,),
                                                  jnp.float32)
    return params


if __name__ == "__main__":
    key = jax.random.PRNGKey(0)
    k0, k1, k2, k3, kp = jax.random.split(key, 5)

    # All branches pool down to 16x16 => M = 2*16*16 = 512 -> TM=128, grid=(4,).
    in_ch0, in_ch1, in_ch2, in_ch3 = 4, 8, 8, 16
    out_ch = 32
    x0  = jax.random.normal(k0, (2, in_ch0, 256, 256), jnp.float32)  # MaxPool2d(16)
    x   = jax.random.normal(k1, (2, in_ch1, 128, 128), jnp.float32)  # MaxPool2d(8)
    x1c = jax.random.normal(k2, (2, in_ch2, 64, 64),   jnp.float32)  # MaxPool2d(4)
    x2c = jax.random.normal(k3, (2, in_ch3, 32, 32),   jnp.float32)  # MaxPool2d(2)

    params = _make_params(kp, (in_ch0, in_ch1, in_ch2, in_ch3), out_ch)
    w_bd, b_col = prepare_params(params)      # built once, outside the jit path

    fwd = jax.jit(encoderx4_forward)
    out = fwd(x0, x, x1c, x2c, w_bd, b_col)
    out = jax.block_until_ready(out)

    ref = _ref_forward(x0, x, x1c, x2c, params)
    assert out.shape == (2, out_ch, 16, 16), out.shape
    err = float(jnp.max(jnp.abs(out - ref)))
    assert jnp.allclose(out, ref, atol=1e-4, rtol=1e-4), err

    print("KERNEL_OK")
</pallas_src>

<mosaic_0001>
module attributes {stable_mosaic.version = 11 : i64} {
  func.func @_encoderx4_kernel(%arg0: i32, %arg1: memref<16x4x128xf32, #tpu.memory_space<vmem>>, %arg2: memref<8x8x128xf32, #tpu.memory_space<vmem>>, %arg3: memref<4x8x128xf32, #tpu.memory_space<vmem>>, %arg4: memref<2x16x128xf32, #tpu.memory_space<vmem>>, %arg5: memref<32x40xf32, #tpu.memory_space<vmem>>, %arg6: memref<32x1xf32, #tpu.memory_space<vmem>>, %arg7: memref<32x128xf32, #tpu.memory_space<vmem>>) attributes {dimension_semantics = [#tpu.dimension_semantics<parallel>], iteration_bounds = array<i64: 4>, scalar_prefetch = 0 : i64, scratch_operands = 0 : i64, tpu.core_type = #tpu.core_type<tc>, window_params = [{transform_indices = @transform_0, window_bounds = array<i64: 16, 4, 128>}, {transform_indices = @transform_1, window_bounds = array<i64: 8, 8, 128>}, {transform_indices = @transform_2, window_bounds = array<i64: 4, 8, 128>}, {transform_indices = @transform_3, window_bounds = array<i64: 2, 16, 128>}, {pipeline_mode = #tpu.pipeline_mode<synchronous>, transform_indices = @transform_4, window_bounds = array<i64: 32, 40>}, {pipeline_mode = #tpu.pipeline_mode<synchronous>, transform_indices = @transform_5, window_bounds = array<i64: 32, 1>}, {transform_indices = @transform_6, window_bounds = array<i64: 32, 128>}]} {
    %c0 = arith.constant 0 : index
    %c0_0 = arith.constant 0 : index
    %c0_1 = arith.constant 0 : index
    %0 = vector.load %arg1[%c0, %c0_0, %c0_1] : memref<16x4x128xf32, #tpu.memory_space<vmem>>, vector<16x4x128xf32>
    %cst = arith.constant dense<0xFF800000> : vector<4x128xf32>
    %1 = vector.multi_reduction <maximumf>, %0, %cst [0] : vector<16x4x128xf32> to vector<4x128xf32>
    %cst_2 = arith.constant 0.000000e+00 : f32
    %2 = vector.broadcast %cst_2 : f32 to vector<4x128xf32>
    %3 = tpu.concatenate %1, %2 in 0 : vector<4x128xf32>, vector<4x128xf32> -> vector<8x128xf32>
    %c0_3 = arith.constant 0 : index
    %c0_4 = arith.constant 0 : index
    %c0_5 = arith.constant 0 : index
    %4 = vector.load %arg2[%c0_3, %c0_4, %c0_5] : memref<8x8x128xf32, #tpu.memory_space<vmem>>, vector<8x8x128xf32>
    %cst_6 = arith.constant dense<0xFF800000> : vector<8x128xf32>
    %5 = vector.multi_reduction <maximumf>, %4, %cst_6 [0] : vector<8x8x128xf32> to vector<8x128xf32>
    %c0_7 = arith.constant 0 : index
    %c0_8 = arith.constant 0 : index
    %c0_9 = arith.constant 0 : index
    %6 = vector.load %arg3[%c0_7, %c0_8, %c0_9] : memref<4x8x128xf32, #tpu.memory_space<vmem>>, vector<4x8x128xf32>
    %cst_10 = arith.constant dense<0xFF800000> : vector<8x128xf32>
    %7 = vector.multi_reduction <maximumf>, %6, %cst_10 [0] : vector<4x8x128xf32> to vector<8x128xf32>
    %c0_11 = arith.constant 0 : index
    %c0_12 = arith.constant 0 : index
    %c0_13 = arith.constant 0 : index
    %8 = vector.load %arg4[%c0_11, %c0_12, %c0_13] : memref<2x16x128xf32, #tpu.memory_space<vmem>>, vector<2x16x128xf32>
    %cst_14 = arith.constant dense<0xFF800000> : vector<16x128xf32>
    %9 = vector.multi_reduction <maximumf>, %8, %cst_14 [0] : vector<2x16x128xf32> to vector<16x128xf32>
    %10 = tpu.concatenate %3, %5, %7, %9 in 0 : vector<8x128xf32>, vector<8x128xf32>, vector<8x128xf32>, vector<16x128xf32> -> vector<40x128xf32>
    %c0_15 = arith.constant 0 : index
    %c0_16 = arith.constant 0 : index
    %11 = vector.load %arg5[%c0_15, %c0_16] : memref<32x40xf32, #tpu.memory_space<vmem>>, vector<32x40xf32>
    %cst_17 = arith.constant dense<0.000000e+00> : vector<32x128xf32>
    %12 = tpu.matmul %11, %10, %cst_17 {dimension_numbers = #tpu.dot_dimension_numbers<[1], [0], [0], [1], [0, 0, 1, 1], [], []>} : vector<32x40xf32>, vector<40x128xf32>, vector<32x128xf32> -> vector<32x128xf32>
    %c0_18 = arith.constant 0 : index
    %c0_19 = arith.constant 0 : index
    %13 = vector.load %arg6[%c0_18, %c0_19] : memref<32x1xf32, #tpu.memory_space<vmem>>, vector<32x1xf32>
    %14 = vector.broadcast %13 : vector<32x1xf32> to vector<32x128xf32>
    %15 = arith.addf %12, %14 : vector<32x128xf32>
    %c0_20 = arith.constant 0 : index
    %c0_21 = arith.constant 0 : index
    %16 = vector.load %arg7[%c0_20, %c0_21] : memref<32x128xf32, #tpu.memory_space<vmem>>, vector<32x128xf32>
    tpu.vector_store %arg7[%c0_20, %c0_21], %15 {strides = array<i32>} : memref<32x128xf32, #tpu.memory_space<vmem>>, vector<32x128xf32>,
    return
  }
  func.func @transform_0(%arg0: i32) -> (i32, i32, i32) {
    %c0_i32 = arith.constant 0 : i32
    %c0_i32_0 = arith.constant 0 : i32
    %c0_i32_1 = arith.constant 0 : i32
    return %c0_i32, %c0_i32_0, %arg0 : i32, i32, i32
  }
  func.func @transform_1(%arg0: i32) -> (i32, i32, i32) {
    %c0_i32 = arith.constant 0 : i32
    %c0_i32_0 = arith.constant 0 : i32
    %c0_i32_1 = arith.constant 0 : i32
    return %c0_i32, %c0_i32_0, %arg0 : i32, i32, i32
  }
  func.func @transform_2(%arg0: i32) -> (i32, i32, i32) {
    %c0_i32 = arith.constant 0 : i32
    %c0_i32_0 = arith.constant 0 : i32
    %c0_i32_1 = arith.constant 0 : i32
    return %c0_i32, %c0_i32_0, %arg0 : i32, i32, i32
  }
  func.func @transform_3(%arg0: i32) -> (i32, i32, i32) {
    %c0_i32 = arith.constant 0 : i32
    %c0_i32_0 = arith.constant 0 : i32
    %c0_i32_1 = arith.constant 0 : i32
    return %c0_i32, %c0_i32_0, %arg0 : i32, i32, i32
  }
  func.func @transform_4(%arg0: i32) -> (i32, i32) {
    %c0_i32 = arith.constant 0 : i32
    %c0_i32_0 = arith.constant 0 : i32
    %c0_i32_1 = arith.constant 0 : i32
    return %c0_i32, %c0_i32_0 : i32, i32
  }
  func.func @transform_5(%arg0: i32) -> (i32, i32) {
    %c0_i32 = arith.constant 0 : i32
    %c0_i32_0 = arith.constant 0 : i32
    %c0_i32_1 = arith.constant 0 : i32
    return %c0_i32, %c0_i32_0 : i32, i32
  }
  func.func @transform_6(%arg0: i32) -> (i32, i32) {
    %c0_i32 = arith.constant 0 : i32
    %c0_i32_0 = arith.constant 0 : i32
    return %c0_i32, %arg0 : i32, i32
  }
}

</mosaic_0001>

<llo_original>
// kernel: encoderx4_forward.1
$region0: #{encoderx4_forward.1}
  #allocation0 [shape = 'u32[]', space=smem, size = 0x4, offset = 0x4, fixed_abs, tag = 'smem constant byte address 0x4 - core index']
  #allocation1 [shape = 'u32[72,128]{1,0:T(1,128)}', space=vmem, size = 0x9000, scoped, tag = 'internal scratch']
  %s0 = inlined_call_operand.vmem [shape: f32[16,4,512], index: 0, kind: input, shape index: {}]
  %s1 = inlined_call_operand.vmem [shape: f32[8,8,512], index: 1, kind: input, shape index: {}]
  %s2 = inlined_call_operand.vmem [shape: f32[4,8,512], index: 2, kind: input, shape index: {}]
  %s3 = inlined_call_operand.vmem [shape: f32[2,16,512], index: 3, kind: input, shape index: {}]
  %s4 = inlined_call_operand.vmem [shape: f32[32,40], index: 4, kind: input, shape index: {}]
  %s5 = inlined_call_operand.vmem [shape: f32[32,1], index: 5, kind: input, shape index: {}]
  %s6 = inlined_call_operand.vmem [shape: f32[32,512], index: 6, kind: output, shape index: {}]
  %s7 = sld [smem:[#allocation0]]
  $region246: #{encoderx4_forward.1} parent=0
    _
  %s9 = ssub.s32 1, %s7
  %s10 = scalar_select 0, %s9, %s7
  $region1: #{encoderx4_forward.1} parent=0
    #allocation2 [shape = 'u8[65536]{0}', space=vmem, size = 0x10000, scoped, tag = 'input window, operand 0']
    #allocation3 [shape = 'u8[65536]{0}', space=vmem, size = 0x10000, scoped, tag = 'input window, operand 1']
    #allocation4 [shape = 'u8[32768]{0}', space=vmem, size = 0x8000, scoped, tag = 'input window, operand 2']
    #allocation5 [shape = 'u8[32768]{0}', space=vmem, size = 0x8000, scoped, tag = 'input window, operand 3']
    #allocation6 [shape = 'u8[32768]{0}', space=vmem, size = 0x8000, scoped, tag = 'output window, operand 0']
    loop: start=0, step=1, limit=6
    $region2: #{encoderx4_forward.1} parent=1 // loop_pre_header
      _
    $region3: #{encoderx4_forward.1} parent=1 // loop_header
      %s12 = sphi 0, %s16
      %p13 = scmp.ge.s32.totalorder %s12, 6
      %s22 = sphi 0, %s24
      %s25 = sphi 0, %s22
      %s26 = sphi 0, %s25
      %s42 = sphi 0, %s26
      %s48 = sphi 0, %s50
      %s51 = sphi 0, %s48
      %s52 = sphi 0, %s51
      %s68 = sphi 0, %s52
      %s74 = sphi 0, %s76
      %s77 = sphi 0, %s74
      %s78 = sphi 0, %s77
      %s94 = sphi 0, %s78
      %s100 = sphi 0, %s102
      %s103 = sphi 0, %s100
      %s104 = sphi 0, %s103
      %s120 = sphi 0, %s104
      %s124 = sphi 0, %s124
      %s126 = sphi 0, %s124
      %s127 = sphi 0, %s126
      %s141 = sphi 0, %s127
      %s145 = sphi 0, %s145
      %s147 = sphi 0, %s145
      %s148 = sphi 0, %s147
      %s162 = sphi 0, %s148
      %s168 = sphi 0, %s170
      %s171 = sphi 0, %s168
      %s172 = sphi 0, %s171
      %s188 = sphi 0, %s172
    $region4: #{encoderx4_forward.1} parent=1 // loop_header_branch
      %15 = sbr.rel (%p13) target = $region8
    $region5: #{encoderx4_forward.1} parent=1 // loop_body
      %s17 = ssub.s32 %s12, 1
      %s18 = ssub.s32 %s12, 2
      %s19 = sadd.s32 %s12, 1
      %s20 = ssub.s32 %s12, %s19
      %p21 = scmp.eq.s32.totalorder %s20, 0
      %s23 = sadd.s32 %s22, 1
      %s24 = scalar_select %p21, %s22, %s23
      %p27 = pneg %p21
      %p28 = scmp.eq.s32.totalorder %s12, 3
      %p29 = por %p27, %p28
      %p30 = scmp.ne.s32.totalorder %s22, %s25
      %p31 = scmp.eq.s32.totalorder %s12, 0
      %p32 = por %p30, %p31
      %p33 = scmp.ne.s32.totalorder %s22, %s25
      %p34 = scmp.eq.s32.totalorder %s17, 3
      %p35 = por %p33, %p34
      %p36 = scmp.ne.s32.totalorder %s25, %s26
      %p37 = scmp.eq.s32.totalorder %s17, 0
      %p38 = por %p36, %p37
      %p39 = scmp.ne.s32.totalorder %s25, %s26
      %p40 = scmp.eq.s32.totalorder %s18, 3
      %p41 = por %p39, %p40
      %p43 = scmp.ne.s32.totalorder %s26, %s42
      %p44 = scmp.eq.s32.totalorder %s18, 0
      %p45 = por %p43, %p44
      %s46 = ssub.s32 %s12, %s19
      %p47 = scmp.eq.s32.totalorder %s46, 0
      %s49 = sadd.s32 %s48, 1
      %s50 = scalar_select %p47, %s48, %s49
      %p53 = pneg %p47
      %p54 = scmp.eq.s32.totalorder %s12, 3
      %p55 = por %p53, %p54
      %p56 = scmp.ne.s32.totalorder %s48, %s51
      %p57 = scmp.eq.s32.totalorder %s12, 0
      %p58 = por %p56, %p57
      %p59 = scmp.ne.s32.totalorder %s48, %s51
      %p60 = scmp.eq.s32.totalorder %s17, 3
      %p61 = por %p59, %p60
      %p62 = scmp.ne.s32.totalorder %s51, %s52
      %p63 = scmp.eq.s32.totalorder %s17, 0
      %p64 = por %p62, %p63
      %p65 = scmp.ne.s32.totalorder %s51, %s52
      %p66 = scmp.eq.s32.totalorder %s18, 3
      %p67 = por %p65, %p66
      %p69 = scmp.ne.s32.totalorder %s52, %s68
      %p70 = scmp.eq.s32.totalorder %s18, 0
      %p71 = por %p69, %p70
      %s72 = ssub.s32 %s12, %s19
      %p73 = scmp.eq.s32.totalorder %s72, 0
      %s75 = sadd.s32 %s74, 1
      %s76 = scalar_select %p73, %s74, %s75
      %p79 = pneg %p73
      %p80 = scmp.eq.s32.totalorder %s12, 3
      %p81 = por %p79, %p80
      %p82 = scmp.ne.s32.totalorder %s74, %s77
      %p83 = scmp.eq.s32.totalorder %s12, 0
      %p84 = por %p82, %p83
      %p85 = scmp.ne.s32.totalorder %s74, %s77
      %p86 = scmp.eq.s32.totalorder %s17, 3
      %p87 = por %p85, %p86
      %p88 = scmp.ne.s32.totalorder %s77, %s78
      %p89 = scmp.eq.s32.totalorder %s17, 0
      %p90 = por %p88, %p89
      %p91 = scmp.ne.s32.totalorder %s77, %s78
      %p92 = scmp.eq.s32.totalorder %s18, 3
      %p93 = por %p91, %p92
      %p95 = scmp.ne.s32.totalorder %s78, %s94
      %p96 = scmp.eq.s32.totalorder %s18, 0
      %p97 = por %p95, %p96
      %s98 = ssub.s32 %s12, %s19
      %p99 = scmp.eq.s32.totalorder %s98, 0
      %s101 = sadd.s32 %s100, 1
      %s102 = scalar_select %p99, %s100, %s101
      %p105 = pneg %p99
      %p106 = scmp.eq.s32.totalorder %s12, 3
      %p107 = por %p105, %p106
      %p108 = scmp.ne.s32.totalorder %s100, %s103
      %p109 = scmp.eq.s32.totalorder %s12, 0
      %p110 = por %p108, %p109
      %p111 = scmp.ne.s32.totalorder %s100, %s103
      %p112 = scmp.eq.s32.totalorder %s17, 3
      %p113 = por %p111, %p112
      %p114 = scmp.ne.s32.totalorder %s103, %s104
      %p115 = scmp.eq.s32.totalorder %s17, 0
      %p116 = por %p114, %p115
      %p117 = scmp.ne.s32.totalorder %s103, %s104
      %p118 = scmp.eq.s32.totalorder %s18, 3
      %p119 = por %p117, %p118
      %p121 = scmp.ne.s32.totalorder %s104, %s120
      %p122 = scmp.eq.s32.totalorder %s18, 0
      %p123 = por %p121, %p122
      %s125 = sadd.s32 %s124, 1
      %p128 = scmp.eq.s32.totalorder %s12, 3
      %p129 = scmp.ne.s32.totalorder %s124, %s126
      %p130 = scmp.eq.s32.totalorder %s12, 0
      %p131 = por %p129, %p130
      %p132 = scmp.ne.s32.totalorder %s124, %s126
      %p133 = scmp.eq.s32.totalorder %s17, 3
      %p134 = por %p132, %p133
      %p135 = scmp.ne.s32.totalorder %s126, %s127
      %p136 = scmp.eq.s32.totalorder %s17, 0
      %p137 = por %p135, %p136
      %p138 = scmp.ne.s32.totalorder %s126, %s127
      %p139 = scmp.eq.s32.totalorder %s18, 3
      %p140 = por %p138, %p139
      %p142 = scmp.ne.s32.totalorder %s127, %s141
      %p143 = scmp.eq.s32.totalorder %s18, 0
      %p144 = por %p142, %p143
      %s146 = sadd.s32 %s145, 1
      %p149 = scmp.eq.s32.totalorder %s12, 3
      %p150 = scmp.ne.s32.totalorder %s145, %s147
      %p151 = scmp.eq.s32.totalorder %s12, 0
      %p152 = por %p150, %p151
      %p153 = scmp.ne.s32.totalorder %s145, %s147
      %p154 = scmp.eq.s32.totalorder %s17, 3
      %p155 = por %p153, %p154
      %p156 = scmp.ne.s32.totalorder %s147, %s148
      %p157 = scmp.eq.s32.totalorder %s17, 0
      %p158 = por %p156, %p157
      %p159 = scmp.ne.s32.totalorder %s147, %s148
      %p160 = scmp.eq.s32.totalorder %s18, 3
      %p161 = por %p159, %p160
      %p163 = scmp.ne.s32.totalorder %s148, %s162
      %p164 = scmp.eq.s32.totalorder %s18, 0
      %p165 = por %p163, %p164
      %s166 = ssub.s32 %s12, %s19
      %p167 = scmp.eq.s32.totalorder %s166, 0
      %s169 = sadd.s32 %s168, 1
      %s170 = scalar_select %p167, %s168, %s169
      %p173 = pneg %p167
      %p174 = scmp.eq.s32.totalorder %s12, 3
      %p175 = por %p173, %p174
      %p176 = scmp.ne.s32.totalorder %s168, %s171
      %p177 = scmp.eq.s32.totalorder %s12, 0
      %p178 = por %p176, %p177
      %p179 = scmp.ne.s32.totalorder %s168, %s171
      %p180 = scmp.eq.s32.totalorder %s17, 3
      %p181 = por %p179, %p180
      %p182 = scmp.ne.s32.totalorder %s171, %s172
      %p183 = scmp.eq.s32.totalorder %s17, 0
      %p184 = por %p182, %p183
      %p185 = scmp.ne.s32.totalorder %s171, %s172
      %p186 = scmp.eq.s32.totalorder %s18, 3
      %p187 = por %p185, %p186
      %p189 = scmp.ne.s32.totalorder %s172, %s188
      %p190 = scmp.eq.s32.totalorder %s18, 0
      %p191 = por %p189, %p190
      %p192 = scmp.le.s32.totalorder 1, %s12
      %p193 = scmp.lt.s32.totalorder %s12, 5
      %p194 = pnand %p192, %p193
      %p195 = pneg %p194
      // Predicated region
      $region9: #{encoderx4_forward.1} parent=5 // pred_check
        _
      $region10: #{encoderx4_forward.1} parent=5 // pred_check_branch
        %197 = sbr.rel (%p194) target = $region12
      $region11: #{encoderx4_forward.1} parent=5 // pred_region
        %s198 = ssub.s32 %s12, 1
        // Predicated region
        $region13: #{encoderx4_forward.1} parent=11 // pred_check
          %p199 = pneg %p137
        $region14: #{encoderx4_forward.1} parent=11 // pred_check_branch
          %201 = sbr.rel (%p199) target = $region16
        $region15: #{encoderx4_forward.1} parent=11 // pred_region
          _
        $region16: #{encoderx4_forward.1} parent=11 // pred_fallthru
          _
        // Predicated region
        $region17: #{encoderx4_forward.1} parent=11 // pred_check
          %p202 = pneg %p158
        $region18: #{encoderx4_forward.1} parent=11 // pred_check_branch
          %204 = sbr.rel (%p202) target = $region20
        $region19: #{encoderx4_forward.1} parent=11 // pred_region
          _
        $region20: #{encoderx4_forward.1} parent=11 // pred_fallthru
          _
      $region12: #{encoderx4_forward.1} parent=5 // pred_fallthru
        _
      %p205 = scmp.lt.s32.totalorder %s12, 4
      // Predicated region
      $region21: #{encoderx4_forward.1} parent=5 // pred_check
        %p206 = pneg %p205
      $region22: #{encoderx4_forward.1} parent=5 // pred_check_branch
        %208 = sbr.rel (%p206) target = $region24
      $region23: #{encoderx4_forward.1} parent=5 // pred_region
        // Predicated region
        $region25: #{encoderx4_forward.1} parent=23 // pred_check
          %p209 = pneg %p32
        $region26: #{encoderx4_forward.1} parent=23 // pred_check_branch
          %211 = sbr.rel (%p209) target = $region28
        $region27: #{encoderx4_forward.1} parent=23 // pred_region
          %s212 = sand.u32 %s22, 1
          %s213 = sand.u32 %s22, 1
          %s214 = smul.addr %s213, 64
          %s215 = scalar_lea.vmem [#allocation2], %s214
          %s216 = smul.addr %s12, 4
          %s217 = scalar_lea.vmem %s0, %s216
          // Predicated region
          $region29: #{encoderx4_forward.1} parent=27 // pred_check
            _
          $region30: #{encoderx4_forward.1} parent=27 // pred_check_branch
            %219 = sbr.rel (0) target = $region32
          $region31: #{encoderx4_forward.1} parent=27 // pred_region
            // Predicated region
            $region33: #{encoderx4_forward.1} parent=31 // pred_check
              _
            $region34: #{encoderx4_forward.1} parent=31 // pred_check_branch
              %221 = sbr.rel target = $region36
            $region35: #{encoderx4_forward.1} parent=31 // pred_region
              // Predicated region
              $region48: #{encoderx4_forward.1} parent=35 // pred_check
                _
              $region49: #{encoderx4_forward.1} parent=35 // pred_check_branch
                %267 = sbr.rel (0) target = $region51
              $region50: #{encoderx4_forward.1} parent=35 // pred_region
                loop: start=0, step=1, limit=1
                $region52: #{encoderx4_forward.1} parent=50 // loop_pre_header
                  _
                $region53: #{encoderx4_forward.1} parent=50 // loop_header
                  %s269 = sphi 0, %s273
                  %p270 = scmp.ge.s32.totalorder %s269, 1
                  %s274 = sphi %s217, %s217
                  %s275 = sphi %s215, %s215
                $region54: #{encoderx4_forward.1} parent=50 // loop_header_branch
                  %272 = sbr.rel (%p270) target = $region58
                $region55: #{encoderx4_forward.1} parent=50 // loop_body
                  _
                $region56: #{encoderx4_forward.1} parent=50 // loop_footer
                  %s273 = sadd.s32 1, %s269
                $region57: #{encoderx4_forward.1} parent=50 // loop_footer_branch
                  %268 = sbr.rel target = $region53
                $region58: #{encoderx4_forward.1} parent=50 // loop_exit
                  _
                %s277 = ssub.s32 16, 1
                loop: start=0, step=1, limit=1
                $region59: #{encoderx4_forward.1} parent=50 // loop_pre_header
                  _
                $region60: #{encoderx4_forward.1} parent=50 // loop_header
                  %s279 = sphi 0, %s283
                  %p280 = scmp.ge.s32.totalorder %s279, 1
                  %s284 = sphi %s217, %s217
                  %s285 = sphi %s215, %s215
                $region61: #{encoderx4_forward.1} parent=50 // loop_header_branch
                  %282 = sbr.rel (%p280) target = $region65
                $region62: #{encoderx4_forward.1} parent=50 // loop_body
                  %v286 = vld [vmem:[%s284] sm:%s277]
                  %287 = vst [vmem:[%s285] sm:%s277] %v286
                  %v288 = vld [vmem:[%s284 + $0x10] sm:%s277]
                  %289 = vst [vmem:[%s285 + $0x4] sm:%s277] %v288
                  %v290 = vld [vmem:[%s284 + $0x20] sm:%s277]
                  %291 = vst [vmem:[%s285 + $0x8] sm:%s277] %v290
                  %v292 = vld [vmem:[%s284 + $0x30] sm:%s277]
                  %293 = vst [vmem:[%s285 + $0xc] sm:%s277] %v292
                  %v294 = vld [vmem:[%s284 + $0x40] sm:%s277]
                  %295 = vst [vmem:[%s285 + $0x10] sm:%s277] %v294
                  %v296 = vld [vmem:[%s284 + $0x50] sm:%s277]
                  %297 = vst [vmem:[%s285 + $0x14] sm:%s277] %v296
                  %v298 = vld [vmem:[%s284 + $0x60] sm:%s277]
                  %299 = vst [vmem:[%s285 + $0x18] sm:%s277] %v298
                  %v300 = vld [vmem:[%s284 + $0x70] sm:%s277]
                  %301 = vst [vmem:[%s285 + $0x1c] sm:%s277] %v300
                  %v302 = vld [vmem:[%s284 + $0x80] sm:%s277]
                  %303 = vst [vmem:[%s285 + $0x20] sm:%s277] %v302
                  %v304 = vld [vmem:[%s284 + $0x90] sm:%s277]
                  %305 = vst [vmem:[%s285 + $0x24] sm:%s277] %v304
                  %v306 = vld [vmem:[%s284 + $0xa0] sm:%s277]
                  %307 = vst [vmem:[%s285 + $0x28] sm:%s277] %v306
                  %v308 = vld [vmem:[%s284 + $0xb0] sm:%s277]
                  %309 = vst [vmem:[%s285 + $0x2c] sm:%s277] %v308
                  %v310 = vld [vmem:[%s284 + $0xc0] sm:%s277]
                  %311 = vst [vmem:[%s285 + $0x30] sm:%s277] %v310
                  %v312 = vld [vmem:[%s284 + $0xd0] sm:%s277]
                  %313 = vst [vmem:[%s285 + $0x34] sm:%s277] %v312
                  %v314 = vld [vmem:[%s284 + $0xe0] sm:%s277]
                  %315 = vst [vmem:[%s285 + $0x38] sm:%s277] %v314
                  %v316 = vld [vmem:[%s284 + $0xf0] sm:%s277]
                  %317 = vst [vmem:[%s285 + $0x3c] sm:%s277] %v316
                $region63: #{encoderx4_forward.1} parent=50 // loop_footer
                  %s283 = sadd.s32 1, %s279
                $region64: #{encoderx4_forward.1} parent=50 // loop_footer_branch
                  %278 = sbr.rel target = $region60
                $region65: #{encoderx4_forward.1} parent=50 // loop_exit
                  _
              $region51: #{encoderx4_forward.1} parent=35 // pred_fallthru
                _
            $region36: #{encoderx4_forward.1} parent=31 // pred_fallthru
              _
            // Predicated region
            $region37: #{encoderx4_forward.1} parent=31 // pred_check
              _
            $region38: #{encoderx4_forward.1} parent=31 // pred_check_branch
              %223 = sbr.rel (0) target = $region40
            $region39: #{encoderx4_forward.1} parent=31 // pred_region
              %s225 = ssub.s32 16, 1
              loop: start=0, step=1, limit=1
              $region41: #{encoderx4_forward.1} parent=39 // loop_pre_header
                _
              $region42: #{encoderx4_forward.1} parent=39 // loop_header
                %s227 = sphi 0, %s231
                %p228 = scmp.ge.s32.totalorder %s227, 1
                %s232 = sphi %s217, %s217
                %s233 = sphi %s215, %s215
              $region43: #{encoderx4_forward.1} parent=39 // loop_header_branch
                %230 = sbr.rel (%p228) target = $region47
              $region44: #{encoderx4_forward.1} parent=39 // loop_body
                %v234 = vld [vmem:[%s232] sm:%s225]
                %235 = vst [vmem:[%s233] sm:%s225] %v234
                %v236 = vld [vmem:[%s232 + $0x10] sm:%s225]
                %237 = vst [vmem:[%s233 + $0x4] sm:%s225] %v236
                %v238 = vld [vmem:[%s232 + $0x20] sm:%s225]
                %239 = vst [vmem:[%s233 + $0x8] sm:%s225] %v238
                %v240 = vld [vmem:[%s232 + $0x30] sm:%s225]
                %241 = vst [vmem:[%s233 + $0xc] sm:%s225] %v240
                %v242 = vld [vmem:[%s232 + $0x40] sm:%s225]
                %243 = vst [vmem:[%s233 + $0x10] sm:%s225] %v242
                %v244 = vld [vmem:[%s232 + $0x50] sm:%s225]
                %245 = vst [vmem:[%s233 + $0x14] sm:%s225] %v244
                %v246 = vld [vmem:[%s232 + $0x60] sm:%s225]
                %247 = vst [vmem:[%s233 + $0x18] sm:%s225] %v246
                %v248 = vld [vmem:[%s232 + $0x70] sm:%s225]
                %249 = vst [vmem:[%s233 + $0x1c] sm:%s225] %v248
                %v250 = vld [vmem:[%s232 + $0x80] sm:%s225]
                %251 = vst [vmem:[%s233 + $0x20] sm:%s225] %v250
                %v252 = vld [vmem:[%s232 + $0x90] sm:%s225]
                %253 = vst [vmem:[%s233 + $0x24] sm:%s225] %v252
                %v254 = vld [vmem:[%s232 + $0xa0] sm:%s225]
                %255 = vst [vmem:[%s233 + $0x28] sm:%s225] %v254
                %v256 = vld [vmem:[%s232 + $0xb0] sm:%s225]
                %257 = vst [vmem:[%s233 + $0x2c] sm:%s225] %v256
                %v258 = vld [vmem:[%s232 + $0xc0] sm:%s225]
                %259 = vst [vmem:[%s233 + $0x30] sm:%s225] %v258
                %v260 = vld [vmem:[%s232 + $0xd0] sm:%s225]
                %261 = vst [vmem:[%s233 + $0x34] sm:%s225] %v260
                %v262 = vld [vmem:[%s232 + $0xe0] sm:%s225]
                %263 = vst [vmem:[%s233 + $0x38] sm:%s225] %v262
                %v264 = vld [vmem:[%s232 + $0xf0] sm:%s225]
                %265 = vst [vmem:[%s233 + $0x3c] sm:%s225] %v264
              $region45: #{encoderx4_forward.1} parent=39 // loop_footer
                %s231 = sadd.s32 1, %s227
              $region46: #{encoderx4_forward.1} parent=39 // loop_footer_branch
                %226 = sbr.rel target = $region42
              $region47: #{encoderx4_forward.1} parent=39 // loop_exit
                _
            $region40: #{encoderx4_forward.1} parent=31 // pred_fallthru
              _
          $region32: #{encoderx4_forward.1} parent=27 // pred_fallthru
            _
          %318 = vnop
        $region28: #{encoderx4_forward.1} parent=23 // pred_fallthru
          _
        // Predicated region
        $region66: #{encoderx4_forward.1} parent=23 // pred_check
          %p319 = pneg %p58
        $region67: #{encoderx4_forward.1} parent=23 // pred_check_branch
          %321 = sbr.rel (%p319) target = $region69
        $region68: #{encoderx4_forward.1} parent=23 // pred_region
          %s322 = sand.u32 %s48, 1
          %s323 = sand.u32 %s48, 1
          %s324 = smul.addr %s323, 64
          %s325 = scalar_lea.vmem [#allocation3], %s324
          %s326 = smul.addr %s12, 8
          %s327 = scalar_lea.vmem %s1, %s326
          // Predicated region
          $region70: #{encoderx4_forward.1} parent=68 // pred_check
            _
          $region71: #{encoderx4_forward.1} parent=68 // pred_check_branch
            %329 = sbr.rel (0) target = $region73
          $region72: #{encoderx4_forward.1} parent=68 // pred_region
            // Predicated region
            $region74: #{encoderx4_forward.1} parent=72 // pred_check
              _
            $region75: #{encoderx4_forward.1} parent=72 // pred_check_branch
              %331 = sbr.rel (0) target = $region77
            $region76: #{encoderx4_forward.1} parent=72 // pred_region
              // Predicated region
              $region89: #{encoderx4_forward.1} parent=76 // pred_check
                _
              $region90: #{encoderx4_forward.1} parent=76 // pred_check_branch
                %361 = sbr.rel (0) target = $region92
              $region91: #{encoderx4_forward.1} parent=76 // pred_region
                loop: start=0, step=1, limit=1
                $region93: #{encoderx4_forward.1} parent=91 // loop_pre_header
                  _
                $region94: #{encoderx4_forward.1} parent=91 // loop_header
                  %s363 = sphi 0, %s367
                  %p364 = scmp.ge.s32.totalorder %s363, 1
                  %s368 = sphi %s327, %s327
                  %s369 = sphi %s325, %s325
                $region95: #{encoderx4_forward.1} parent=91 // loop_header_branch
                  %366 = sbr.rel (%p364) target = $region99
                $region96: #{encoderx4_forward.1} parent=91 // loop_body
                  %v370 = vld [vmem:[%s368] sm:$0xff]
                  %371 = vst [vmem:[%s369] sm:$0xff] %v370
                  %v372 = vld [vmem:[%s368 + $0x20] sm:$0xff]
                  %373 = vst [vmem:[%s369 + $0x8] sm:$0xff] %v372
                  %v374 = vld [vmem:[%s368 + $0x40] sm:$0xff]
                  %375 = vst [vmem:[%s369 + $0x10] sm:$0xff] %v374
                  %v376 = vld [vmem:[%s368 + $0x60] sm:$0xff]
                  %377 = vst [vmem:[%s369 + $0x18] sm:$0xff] %v376
                  %v378 = vld [vmem:[%s368 + $0x80] sm:$0xff]
                  %379 = vst [vmem:[%s369 + $0x20] sm:$0xff] %v378
                  %v380 = vld [vmem:[%s368 + $0xa0] sm:$0xff]
                  %381 = vst [vmem:[%s369 + $0x28] sm:$0xff] %v380
                  %v382 = vld [vmem:[%s368 + $0xc0] sm:$0xff]
                  %383 = vst [vmem:[%s369 + $0x30] sm:$0xff] %v382
                  %v384 = vld [vmem:[%s368 + $0xe0] sm:$0xff]
                  %385 = vst [vmem:[%s369 + $0x38] sm:$0xff] %v384
                $region97: #{encoderx4_forward.1} parent=91 // loop_footer
                  %s367 = sadd.s32 1, %s363
                $region98: #{encoderx4_forward.1} parent=91 // loop_footer_branch
                  %362 = sbr.rel target = $region94
                $region99: #{encoderx4_forward.1} parent=91 // loop_exit
                  _
              $region92: #{encoderx4_forward.1} parent=76 // pred_fallthru
                _
              // Predicated region
              $region100: #{encoderx4_forward.1} parent=76 // pred_check
                _
              $region101: #{encoderx4_forward.1} parent=76 // pred_check_branch
                %387 = sbr.rel target = $region103
              $region102: #{encoderx4_forward.1} parent=76 // pred_region
                _
              $region103: #{encoderx4_forward.1} parent=76 // pred_fallthru
                _
            $region77: #{encoderx4_forward.1} parent=72 // pred_fallthru
              _
            // Predicated region
            $region78: #{encoderx4_forward.1} parent=72 // pred_check
              _
            $region79: #{encoderx4_forward.1} parent=72 // pred_check_branch
              %333 = sbr.rel target = $region81
            $region80: #{encoderx4_forward.1} parent=72 // pred_region
              %s335 = ssub.s32 256, 1
              loop: start=0, step=1, limit=1
              $region82: #{encoderx4_forward.1} parent=80 // loop_pre_header
                _
              $region83: #{encoderx4_forward.1} parent=80 // loop_header
                %s337 = sphi 0, %s341
                %p338 = scmp.ge.s32.totalorder %s337, 1
                %s342 = sphi %s327, %s327
                %s343 = sphi %s325, %s325
              $region84: #{encoderx4_forward.1} parent=80 // loop_header_branch
                %340 = sbr.rel (%p338) target = $region88
              $region85: #{encoderx4_forward.1} parent=80 // loop_body
                %v344 = vld [vmem:[%s342] sm:%s335]
                %345 = vst [vmem:[%s343] sm:%s335] %v344
                %v346 = vld [vmem:[%s342 + $0x20] sm:%s335]
                %347 = vst [vmem:[%s343 + $0x8] sm:%s335] %v346
                %v348 = vld [vmem:[%s342 + $0x40] sm:%s335]
                %349 = vst [vmem:[%s343 + $0x10] sm:%s335] %v348
                %v350 = vld [vmem:[%s342 + $0x60] sm:%s335]
                %351 = vst [vmem:[%s343 + $0x18] sm:%s335] %v350
                %v352 = vld [vmem:[%s342 + $0x80] sm:%s335]
                %353 = vst [vmem:[%s343 + $0x20] sm:%s335] %v352
                %v354 = vld [vmem:[%s342 + $0xa0] sm:%s335]
                %355 = vst [vmem:[%s343 + $0x28] sm:%s335] %v354
                %v356 = vld [vmem:[%s342 + $0xc0] sm:%s335]
                %357 = vst [vmem:[%s343 + $0x30] sm:%s335] %v356
                %v358 = vld [vmem:[%s342 + $0xe0] sm:%s335]
                %359 = vst [vmem:[%s343 + $0x38] sm:%s335] %v358
              $region86: #{encoderx4_forward.1} parent=80 // loop_footer
                %s341 = sadd.s32 1, %s337
              $region87: #{encoderx4_forward.1} parent=80 // loop_footer_branch
                %336 = sbr.rel target = $region83
              $region88: #{encoderx4_forward.1} parent=80 // loop_exit
                _
            $region81: #{encoderx4_forward.1} parent=72 // pred_fallthru
              _
          $region73: #{encoderx4_forward.1} parent=68 // pred_fallthru
            _
          %388 = vnop
        $region69: #{encoderx4_forward.1} parent=23 // pred_fallthru
          _
        // Predicated region
        $region104: #{encoderx4_forward.1} parent=23 // pred_check
          %p389 = pneg %p84
        $region105: #{encoderx4_forward.1} parent=23 // pred_check_branch
          %391 = sbr.rel (%p389) target = $region107
        $region106: #{encoderx4_forward.1} parent=23 // pred_region
          %s392 = sand.u32 %s74, 1
          %s393 = sand.u32 %s74, 1
          %s394 = smul.addr %s393, 32
          %s395 = scalar_lea.vmem [#allocation4], %s394
          %s396 = smul.addr %s12, 8
          %s397 = scalar_lea.vmem %s2, %s396
          // Predicated region
          $region108: #{encoderx4_forward.1} parent=106 // pred_check
            _
          $region109: #{encoderx4_forward.1} parent=106 // pred_check_branch
            %399 = sbr.rel (0) target = $region111
          $region110: #{encoderx4_forward.1} parent=106 // pred_region
            // Predicated region
            $region112: #{encoderx4_forward.1} parent=110 // pred_check
              _
            $region113: #{encoderx4_forward.1} parent=110 // pred_check_branch
              %401 = sbr.rel (0) target = $region115
            $region114: #{encoderx4_forward.1} parent=110 // pred_region
              // Predicated region
              $region127: #{encoderx4_forward.1} parent=114 // pred_check
                _
              $region128: #{encoderx4_forward.1} parent=114 // pred_check_branch
                %423 = sbr.rel (0) target = $region130
              $region129: #{encoderx4_forward.1} parent=114 // pred_region
                loop: start=0, step=1, limit=1
                $region131: #{encoderx4_forward.1} parent=129 // loop_pre_header
                  _
                $region132: #{encoderx4_forward.1} parent=129 // loop_header
                  %s425 = sphi 0, %s429
                  %p426 = scmp.ge.s32.totalorder %s425, 1
                  %s430 = sphi %s397, %s397
                  %s431 = sphi %s395, %s395
                $region133: #{encoderx4_forward.1} parent=129 // loop_header_branch
                  %428 = sbr.rel (%p426) target = $region137
                $region134: #{encoderx4_forward.1} parent=129 // loop_body
                  %v432 = vld [vmem:[%s430] sm:$0xff]
                  %433 = vst [vmem:[%s431] sm:$0xff] %v432
                  %v434 = vld [vmem:[%s430 + $0x20] sm:$0xff]
                  %435 = vst [vmem:[%s431 + $0x8] sm:$0xff] %v434
                  %v436 = vld [vmem:[%s430 + $0x40] sm:$0xff]
                  %437 = vst [vmem:[%s431 + $0x10] sm:$0xff] %v436
                  %v438 = vld [vmem:[%s430 + $0x60] sm:$0xff]
                  %439 = vst [vmem:[%s431 + $0x18] sm:$0xff] %v438
                $region135: #{encoderx4_forward.1} parent=129 // loop_footer
                  %s429 = sadd.s32 1, %s425
                $region136: #{encoderx4_forward.1} parent=129 // loop_footer_branch
                  %424 = sbr.rel target = $region132
                $region137: #{encoderx4_forward.1} parent=129 // loop_exit
                  _
              $region130: #{encoderx4_forward.1} parent=114 // pred_fallthru
                _
              // Predicated region
              $region138: #{encoderx4_forward.1} parent=114 // pred_check
                _
              $region139: #{encoderx4_forward.1} parent=114 // pred_check_branch
                %441 = sbr.rel target = $region141
              $region140: #{encoderx4_forward.1} parent=114 // pred_region
                _
              $region141: #{encoderx4_forward.1} parent=114 // pred_fallthru
                _
            $region115: #{encoderx4_forward.1} parent=110 // pred_fallthru
              _
            // Predicated region
            $region116: #{encoderx4_forward.1} parent=110 // pred_check
              _
            $region117: #{encoderx4_forward.1} parent=110 // pred_check_branch
              %403 = sbr.rel target = $region119
            $region118: #{encoderx4_forward.1} parent=110 // pred_region
              %s405 = ssub.s32 256, 1
              loop: start=0, step=1, limit=1
              $region120: #{encoderx4_forward.1} parent=118 // loop_pre_header
                _
              $region121: #{encoderx4_forward.1} parent=118 // loop_header
                %s407 = sphi 0, %s411
                %p408 = scmp.ge.s32.totalorder %s407, 1
                %s412 = sphi %s397, %s397
                %s413 = sphi %s395, %s395
              $region122: #{encoderx4_forward.1} parent=118 // loop_header_branch
                %410 = sbr.rel (%p408) target = $region126
              $region123: #{encoderx4_forward.1} parent=118 // loop_body
                %v414 = vld [vmem:[%s412] sm:%s405]
                %415 = vst [vmem:[%s413] sm:%s405] %v414
                %v416 = vld [vmem:[%s412 + $0x20] sm:%s405]
                %417 = vst [vmem:[%s413 + $0x8] sm:%s405] %v416
                %v418 = vld [vmem:[%s412 + $0x40] sm:%s405]
                %419 = vst [vmem:[%s413 + $0x10] sm:%s405] %v418
                %v420 = vld [vmem:[%s412 + $0x60] sm:%s405]
                %421 = vst [vmem:[%s413 + $0x18] sm:%s405] %v420
              $region124: #{encoderx4_forward.1} parent=118 // loop_footer
                %s411 = sadd.s32 1, %s407
              $region125: #{encoderx4_forward.1} parent=118 // loop_footer_branch
                %406 = sbr.rel target = $region121
              $region126: #{encoderx4_forward.1} parent=118 // loop_exit
                _
            $region119: #{encoderx4_forward.1} parent=110 // pred_fallthru
              _
          $region111: #{encoderx4_forward.1} parent=106 // pred_fallthru
            _
          %442 = vnop
        $region107: #{encoderx4_forward.1} parent=23 // pred_fallthru
          _
        // Predicated region
        $region142: #{encoderx4_forward.1} parent=23 // pred_check
          %p443 = pneg %p110
        $region143: #{encoderx4_forward.1} parent=23 // pred_check_branch
          %445 = sbr.rel (%p443) target = $region145
        $region144: #{encoderx4_forward.1} parent=23 // pred_region
          %s446 = sand.u32 %s100, 1
          %s447 = sand.u32 %s100, 1
          %s448 = smul.addr %s447, 32
          %s449 = scalar_lea.vmem [#allocation5], %s448
          %s450 = smul.addr %s12, 8
          %s451 = scalar_lea.vmem %s3, %s450
          // Predicated region
          $region146: #{encoderx4_forward.1} parent=144 // pred_check
            _
          $region147: #{encoderx4_forward.1} parent=144 // pred_check_branch
            %453 = sbr.rel (0) target = $region149
          $region148: #{encoderx4_forward.1} parent=144 // pred_region
            // Predicated region
            $region150: #{encoderx4_forward.1} parent=148 // pred_check
              _
            $region151: #{encoderx4_forward.1} parent=148 // pred_check_branch
              %455 = sbr.rel (0) target = $region153
            $region152: #{encoderx4_forward.1} parent=148 // pred_region
              // Predicated region
              $region165: #{encoderx4_forward.1} parent=152 // pred_check
                _
              $region166: #{encoderx4_forward.1} parent=152 // pred_check_branch
                %477 = sbr.rel (0) target = $region168
              $region167: #{encoderx4_forward.1} parent=152 // pred_region
                loop: start=0, step=1, limit=1
                $region169: #{encoderx4_forward.1} parent=167 // loop_pre_header
                  _
                $region170: #{encoderx4_forward.1} parent=167 // loop_header
                  %s479 = sphi 0, %s483
                  %p480 = scmp.ge.s32.totalorder %s479, 1
                  %s484 = sphi %s451, %s451
                  %s485 = sphi %s449, %s449
                $region171: #{encoderx4_forward.1} parent=167 // loop_header_branch
                  %482 = sbr.rel (%p480) target = $region175
                $region172: #{encoderx4_forward.1} parent=167 // loop_body
                  %v486 = vld [vmem:[%s484] sm:$0xff]
                  %487 = vst [vmem:[%s485] sm:$0xff] %v486
                  %v488 = vld [vmem:[%s484 + $0x20] sm:$0xff]
                  %489 = vst [vmem:[%s485 + $0x8] sm:$0xff] %v488
                  %v490 = vld [vmem:[%s484 + $0x40] sm:$0xff]
                  %491 = vst [vmem:[%s485 + $0x10] sm:$0xff] %v490
                  %v492 = vld [vmem:[%s484 + $0x60] sm:$0xff]
                  %493 = vst [vmem:[%s485 + $0x18] sm:$0xff] %v492
                $region173: #{encoderx4_forward.1} parent=167 // loop_footer
                  %s483 = sadd.s32 1, %s479
                $region174: #{encoderx4_forward.1} parent=167 // loop_footer_branch
                  %478 = sbr.rel target = $region170
                $region175: #{encoderx4_forward.1} parent=167 // loop_exit
                  _
              $region168: #{encoderx4_forward.1} parent=152 // pred_fallthru
                _
              // Predicated region
              $region176: #{encoderx4_forward.1} parent=152 // pred_check
                _
              $region177: #{encoderx4_forward.1} parent=152 // pred_check_branch
                %495 = sbr.rel target = $region179
              $region178: #{encoderx4_forward.1} parent=152 // pred_region
                _
              $region179: #{encoderx4_forward.1} parent=152 // pred_fallthru
                _
            $region153: #{encoderx4_forward.1} parent=148 // pred_fallthru
              _
            // Predicated region
            $region154: #{encoderx4_forward.1} parent=148 // pred_check
              _
            $region155: #{encoderx4_forward.1} parent=148 // pred_check_branch
              %457 = sbr.rel target = $region157
            $region156: #{encoderx4_forward.1} parent=148 // pred_region
              %s459 = ssub.s32 256, 1
              loop: start=0, step=1, limit=1
              $region158: #{encoderx4_forward.1} parent=156 // loop_pre_header
                _
              $region159: #{encoderx4_forward.1} parent=156 // loop_header
                %s461 = sphi 0, %s465
                %p462 = scmp.ge.s32.totalorder %s461, 1
                %s466 = sphi %s451, %s451
                %s467 = sphi %s449, %s449
              $region160: #{encoderx4_forward.1} parent=156 // loop_header_branch
                %464 = sbr.rel (%p462) target = $region164
              $region161: #{encoderx4_forward.1} parent=156 // loop_body
                %v468 = vld [vmem:[%s466] sm:%s459]
                %469 = vst [vmem:[%s467] sm:%s459] %v468
                %v470 = vld [vmem:[%s466 + $0x20] sm:%s459]
                %471 = vst [vmem:[%s467 + $0x8] sm:%s459] %v470
                %v472 = vld [vmem:[%s466 + $0x40] sm:%s459]
                %473 = vst [vmem:[%s467 + $0x10] sm:%s459] %v472
                %v474 = vld [vmem:[%s466 + $0x60] sm:%s459]
                %475 = vst [vmem:[%s467 + $0x18] sm:%s459] %v474
              $region162: #{encoderx4_forward.1} parent=156 // loop_footer
                %s465 = sadd.s32 1, %s461
              $region163: #{encoderx4_forward.1} parent=156 // loop_footer_branch
                %460 = sbr.rel target = $region159
              $region164: #{encoderx4_forward.1} parent=156 // loop_exit
                _
            $region157: #{encoderx4_forward.1} parent=148 // pred_fallthru
              _
          $region149: #{encoderx4_forward.1} parent=144 // pred_fallthru
            _
          %496 = vnop
        $region145: #{encoderx4_forward.1} parent=23 // pred_fallthru
          _
      $region24: #{encoderx4_forward.1} parent=5 // pred_fallthru
        _
      %p497 = scmp.le.s32.totalorder 1, %s12
      %p498 = scmp.lt.s32.totalorder %s12, 5
      %p499 = pnand %p497, %p498
      %p500 = pneg %p499
      // Predicated region
      $region180: #{encoderx4_forward.1} parent=5 // pred_check
        _
      $region181: #{encoderx4_forward.1} parent=5 // pred_check_branch
        %502 = sbr.rel (%p499) target = $region183
      $region182: #{encoderx4_forward.1} parent=5 // pred_region
        %s503 = ssub.s32 %s12, 1
        %s504 = sand.u32 %s25, 1
        %s505 = sand.u32 %s25, 1
        %s506 = smul.addr %s505, 64
        %s507 = scalar_lea.vmem [#allocation2], %s506
        // Predicated region
        $region184: #{encoderx4_forward.1} parent=182 // pred_check
          %p508 = pneg %p38
        $region185: #{encoderx4_forward.1} parent=182 // pred_check_branch
          %510 = sbr.rel (%p508) target = $region187
        $region186: #{encoderx4_forward.1} parent=182 // pred_region
          _
        $region187: #{encoderx4_forward.1} parent=182 // pred_fallthru
          _
        %s511 = sand.u32 %s51, 1
        %s512 = sand.u32 %s51, 1
        %s513 = smul.addr %s512, 64
        %s514 = scalar_lea.vmem [#allocation3], %s513
        // Predicated region
        $region188: #{encoderx4_forward.1} parent=182 // pred_check
          %p515 = pneg %p64
        $region189: #{encoderx4_forward.1} parent=182 // pred_check_branch
          %517 = sbr.rel (%p515) target = $region191
        $region190: #{encoderx4_forward.1} parent=182 // pred_region
          _
        $region191: #{encoderx4_forward.1} parent=182 // pred_fallthru
          _
        %s518 = sand.u32 %s77, 1
        %s519 = sand.u32 %s77, 1
        %s520 = smul.addr %s519, 32
        %s521 = scalar_lea.vmem [#allocation4], %s520
        // Predicated region
        $region192: #{encoderx4_forward.1} parent=182 // pred_check
          %p522 = pneg %p90
        $region193: #{encoderx4_forward.1} parent=182 // pred_check_branch
          %524 = sbr.rel (%p522) target = $region195
        $region194: #{encoderx4_forward.1} parent=182 // pred_region
          _
        $region195: #{encoderx4_forward.1} parent=182 // pred_fallthru
          _
        %s525 = sand.u32 %s103, 1
        %s526 = sand.u32 %s103, 1
        %s527 = smul.addr %s526, 32
        %s528 = scalar_lea.vmem [#allocation5], %s527
        // Predicated region
        $region196: #{encoderx4_forward.1} parent=182 // pred_check
          %p529 = pneg %p116
        $region197: #{encoderx4_forward.1} parent=182 // pred_check_branch
          %531 = sbr.rel (%p529) target = $region199
        $region198: #{encoderx4_forward.1} parent=182 // pred_region
          _
        $region199: #{encoderx4_forward.1} parent=182 // pred_fallthru
          _
        %s532 = sand.u32 %s25, 1
        %s533 = sand.u32 %s25, 1
        %s534 = smul.addr %s533, 64
        %s535 = scalar_lea.vmem [#allocation2], %s534
        %p536 = pneg %p38
        %p537 = pneg %p35
        %s538 = sand.u32 %s51, 1
        %s539 = sand.u32 %s51, 1
        %s540 = smul.addr %s539, 64
        %s541 = scalar_lea.vmem [#allocation3], %s540
        %p542 = pneg %p64
        %p543 = pneg %p61
        %s544 = sand.u32 %s77, 1
        %s545 = sand.u32 %s77, 1
        %s546 = smul.addr %s545, 32
        %s547 = scalar_lea.vmem [#allocation4], %s546
        %p548 = pneg %p90
        %p549 = pneg %p87
        %s550 = sand.u32 %s103, 1
        %s551 = sand.u32 %s103, 1
        %s552 = smul.addr %s551, 32
        %s553 = scalar_lea.vmem [#allocation5], %s552
        %p554 = pneg %p116
        %p555 = pneg %p113
        %p556 = pneg %p137
        %p557 = pneg %p134
        %p558 = pneg %p158
        %p559 = pneg %p155
        %p560 = pneg %p184
        %p561 = pneg %p181
        %s562 = sand.u32 %s171, 1
        %s563 = sand.u32 %s171, 1
        %s564 = smul.addr %s563, 32
        %s565 = scalar_lea.vmem [#allocation6], %s564
        %v566 = vld [vmem:[%s507] sm:$0xf]
        %v567 = vld [vmem:[%s507 + $0x4] sm:$0xf]
        %v568 = vld [vmem:[%s507 + $0x8] sm:$0xf]
        %v569 = vld [vmem:[%s507 + $0xc] sm:$0xf]
        %v570 = vld [vmem:[%s507 + $0x10] sm:$0xf]
        %v571 = vld [vmem:[%s507 + $0x14] sm:$0xf]
        %v572 = vld [vmem:[%s507 + $0x18] sm:$0xf]
        %v573 = vld [vmem:[%s507 + $0x1c] sm:$0xf]
        %v574 = vld [vmem:[%s507 + $0x20] sm:$0xf]
        %v575 = vld [vmem:[%s507 + $0x24] sm:$0xf]
        %v576 = vld [vmem:[%s507 + $0x28] sm:$0xf]
        %v577 = vld [vmem:[%s507 + $0x2c] sm:$0xf]
        %v578 = vld [vmem:[%s507 + $0x30] sm:$0xf]
        %v579 = vld [vmem:[%s507 + $0x34] sm:$0xf]
        %v580 = vld [vmem:[%s507 + $0x38] sm:$0xf]
        %v581 = vld [vmem:[%s507 + $0x3c] sm:$0xf]
        %vm582 = vcmask 1043456
        %v583 = vsel %vm582, %v566, -inf
        %v584 = vsel %vm582, %v567, -inf
        %v585 = vsel %vm582, %v568, -inf
        %v586 = vsel %vm582, %v569, -inf
        %v587 = vsel %vm582, %v570, -inf
        %v588 = vmax.f32 %v583, %v587
        %v589 = vsel %vm582, %v571, -inf
        %v590 = vmax.f32 %v584, %v589
        %v591 = vsel %vm582, %v572, -inf
        %v592 = vmax.f32 %v585, %v591
        %v593 = vsel %vm582, %v573, -inf
        %v594 = vmax.f32 %v586, %v593
        %v595 = vsel %vm582, %v574, -inf
        %v596 = vmax.f32 %v588, %v595
        %v597 = vsel %vm582, %v575, -inf
        %v598 = vmax.f32 %v590, %v597
        %v599 = vsel %vm582, %v576, -inf
        %v600 = vmax.f32 %v592, %v599
        %v601 = vsel %vm582, %v577, -inf
        %v602 = vmax.f32 %v594, %v601
        %v603 = vsel %vm582, %v578, -inf
        %v604 = vmax.f32 %v596, %v603
        %v605 = vsel %vm582, %v579, -inf
        %v606 = vmax.f32 %v598, %v605
        %v607 = vsel %vm582, %v580, -inf
        %v608 = vmax.f32 %v600, %v607
        %v609 = vsel %vm582, %v581, -inf
        %v610 = vmax.f32 %v602, %v609
        %v611 = vmax.f32 %v604, %v606
        %v612 = vmax.f32 %v608, %v610
        %v613 = vmax.f32 %v611, %v612
        %v614 = vsel %vm582, %v613, 0.0
        %v615 = vld [vmem:[%s514] sm:$0xff]
        %v616 = vld [vmem:[%s514 + $0x8] sm:$0xff]
        %v617 = vld [vmem:[%s514 + $0x10] sm:$0xff]
        %v618 = vld [vmem:[%s514 + $0x18] sm:$0xff]
        %v619 = vld [vmem:[%s514 + $0x20] sm:$0xff]
        %v620 = vld [vmem:[%s514 + $0x28] sm:$0xff]
        %v621 = vld [vmem:[%s514 + $0x30] sm:$0xff]
        %v622 = vld [vmem:[%s514 + $0x38] sm:$0xff]
        %v623 = vmax.f32 %v615, %v619
        %v624 = vmax.f32 %v616, %v620
        %v625 = vmax.f32 %v617, %v621
        %v626 = vmax.f32 %v618, %v622
        %v627 = vmax.f32 %v623, %v624
        %v628 = vmax.f32 %v625, %v626
        %v629 = vmax.f32 %v627, %v628
        %v630 = vld [vmem:[%s521] sm:$0xff]
        %v631 = vld [vmem:[%s521 + $0x8] sm:$0xff]
        %v632 = vld [vmem:[%s521 + $0x10] sm:$0xff]
        %v633 = vld [vmem:[%s521 + $0x18] sm:$0xff]
        %v634 = vmax.f32 %v630, %v631
        %v635 = vmax.f32 %v632, %v633
        %v636 = vmax.f32 %v634, %v635
        %v637 = vld [vmem:[%s528] sm:$0xff]
        %v638 = vld [vmem:[%s528 + $0x8] sm:$0xff]
        %v639 = vld [vmem:[%s528 + $0x10] sm:$0xff]
        %v640 = vld [vmem:[%s528 + $0x18] sm:$0xff]
        %v641 = vmax.f32 %v637, %v639
        %v642 = vmax.f32 %v638, %v640
        %v643 = vld [vmem:[%s4] sm:$0xff]
        %v644 = vld [vmem:[%s4 + $0x8] sm:$0xff]
        %v645 = vld [vmem:[%s4 + $0x10] sm:$0xff]
        %v646 = vld [vmem:[%s4 + $0x18] sm:$0xff]
        %v647 = vld [vmem:[%s5] sm:$0xff]
        %v648 = vld [vmem:[%s5 + $0x8] sm:$0xff]
        %v649 = vld [vmem:[%s5 + $0x10] sm:$0xff]
        %v650 = vld [vmem:[%s5 + $0x18] sm:$0xff]
        %652 = vset.pattern.permute.xlu0 0
        %653 = vperm.xlu0 %652, %v647
        %v654 = vpop.permute.xlu0 %653
        %657 = vset.pattern.permute.xlu0 0
        %658 = vperm.xlu0 %657, %v648
        %v659 = vpop.permute.xlu0 %658
        %662 = vset.pattern.permute.xlu0 0
        %663 = vperm.xlu0 %662, %v649
        %v664 = vpop.permute.xlu0 %663
        %667 = vset.pattern.permute.xlu0 0
        %668 = vperm.xlu0 %667, %v650
        %v669 = vpop.permute.xlu0 %668
        %vm671 = vcmask 326656
        %v673 = vsel %vm671, %v643, 0
        %v676 = vsel %vm671, %v644, 0
        %v679 = vsel %vm671, %v645, 0
        %v682 = vsel %vm671, %v646, 0
        %684 = vmatpush.msra.mxu0 0.0
        %685 = vmatpush.msra.mxu0 0.0
        %686 = vmatpush.msra.mxu0 0.0
        %687 = vmatpush.msra.mxu0 0.0
        %688 = vmatpush.msra.mxu0 0.0
        %689 = vmatpush.msra.mxu0 0.0
        %690 = vmatpush.msra.mxu0 0.0
        %691 = vmatpush.msra.mxu0 0.0
        %692 = vmatpush.msra.mxu0 0.0
        %693 = vmatpush.msra.mxu0 0.0
        %694 = vmatpush.msra.mxu0 0.0
        %695 = vmatpush.msra.mxu0 %v642
        %696 = vmatpush.msra.mxu0 %v641
        %697 = vmatpush.msra.mxu0 %v636
        %698 = vmatpush.msra.mxu0 %v629
        %699 = vmatpush.msra.mxu0 %v614
        %700 = vmatmul.f32.gmra.mxu0 %v673
        %v701 = vpop.f32.mrf.mxu0
        %v702 = vadd.f32 %v654, %v701
        %703 = vmatmul.f32.gmra.mxu0 %v676
        %v704 = vpop.f32.mrf.mxu0
        %v705 = vadd.f32 %v659, %v704
        %706 = vmatmul.f32.gmra.mxu0 %v679
        %v707 = vpop.f32.mrf.mxu0
        %v708 = vadd.f32 %v664, %v707
        %709 = vmatmul.f32.gmra.mxu0 %v682
        %v710 = vpop.f32.mrf.mxu0
        %v711 = vadd.f32 %v669, %v710
        %712 = vdwg.mxu0
        %713 = vst [vmem:[%s565] sm:$0xff] %v702
        %714 = vst [vmem:[%s565 + $0x8] sm:$0xff] %v705
        %715 = vst [vmem:[%s565 + $0x10] sm:$0xff] %v708
        %716 = vst [vmem:[%s565 + $0x18] sm:$0xff] %v711
        %s717 = sand.u32 %s171, 1
        %s718 = sand.u32 %s171, 1
        %s719 = smul.addr %s718, 32
        %s720 = scalar_lea.vmem [#allocation6], %s719
        // Predicated region
        $region200: #{encoderx4_forward.1} parent=182 // pred_check
          %p721 = pneg %p181
        $region201: #{encoderx4_forward.1} parent=182 // pred_check_branch
          %723 = sbr.rel (%p721) target = $region203
        $region202: #{encoderx4_forward.1} parent=182 // pred_region
          %s724 = smul.addr %s17, 8
          %s725 = scalar_lea.vmem %s6, %s724
          // Predicated region
          $region204: #{encoderx4_forward.1} parent=202 // pred_check
            _
          $region205: #{encoderx4_forward.1} parent=202 // pred_check_branch
            %727 = sbr.rel (0) target = $region207
          $region206: #{encoderx4_forward.1} parent=202 // pred_region
            // Predicated region
            $region208: #{encoderx4_forward.1} parent=206 // pred_check
              _
            $region209: #{encoderx4_forward.1} parent=206 // pred_check_branch
              %729 = sbr.rel (0) target = $region211
            $region210: #{encoderx4_forward.1} parent=206 // pred_region
              // Predicated region
              $region223: #{encoderx4_forward.1} parent=210 // pred_check
                _
              $region224: #{encoderx4_forward.1} parent=210 // pred_check_branch
                %751 = sbr.rel (0) target = $region226
              $region225: #{encoderx4_forward.1} parent=210 // pred_region
                loop: start=0, step=1, limit=1
                $region227: #{encoderx4_forward.1} parent=225 // loop_pre_header
                  _
                $region228: #{encoderx4_forward.1} parent=225 // loop_header
                  %s753 = sphi 0, %s757
                  %p754 = scmp.ge.s32.totalorder %s753, 1
                  %s758 = sphi %s720, %s720
                  %s759 = sphi %s725, %s725
                $region229: #{encoderx4_forward.1} parent=225 // loop_header_branch
                  %756 = sbr.rel (%p754) target = $region233
                $region230: #{encoderx4_forward.1} parent=225 // loop_body
                  %v760 = vld [vmem:[%s758] sm:$0xff]
                  %761 = vst [vmem:[%s759] sm:$0xff] %v760
                  %v762 = vld [vmem:[%s758 + $0x8] sm:$0xff]
                  %763 = vst [vmem:[%s759 + $0x20] sm:$0xff] %v762
                  %v764 = vld [vmem:[%s758 + $0x10] sm:$0xff]
                  %765 = vst [vmem:[%s759 + $0x40] sm:$0xff] %v764
                  %v766 = vld [vmem:[%s758 + $0x18] sm:$0xff]
                  %767 = vst [vmem:[%s759 + $0x60] sm:$0xff] %v766
                $region231: #{encoderx4_forward.1} parent=225 // loop_footer
                  %s757 = sadd.s32 1, %s753
                $region232: #{encoderx4_forward.1} parent=225 // loop_footer_branch
                  %752 = sbr.rel target = $region228
                $region233: #{encoderx4_forward.1} parent=225 // loop_exit
                  _
              $region226: #{encoderx4_forward.1} parent=210 // pred_fallthru
                _
              // Predicated region
              $region234: #{encoderx4_forward.1} parent=210 // pred_check
                _
              $region235: #{encoderx4_forward.1} parent=210 // pred_check_branch
                %769 = sbr.rel target = $region237
              $region236: #{encoderx4_forward.1} parent=210 // pred_region
                _
              $region237: #{encoderx4_forward.1} parent=210 // pred_fallthru
                _
            $region211: #{encoderx4_forward.1} parent=206 // pred_fallthru
              _
            // Predicated region
            $region212: #{encoderx4_forward.1} parent=206 // pred_check
              _
            $region213: #{encoderx4_forward.1} parent=206 // pred_check_branch
              %731 = sbr.rel target = $region215
            $region214: #{encoderx4_forward.1} parent=206 // pred_region
              %s733 = ssub.s32 256, 1
              loop: start=0, step=1, limit=1
              $region216: #{encoderx4_forward.1} parent=214 // loop_pre_header
                _
              $region217: #{encoderx4_forward.1} parent=214 // loop_header
                %s735 = sphi 0, %s739
                %p736 = scmp.ge.s32.totalorder %s735, 1
                %s740 = sphi %s720, %s720
                %s741 = sphi %s725, %s725
              $region218: #{encoderx4_forward.1} parent=214 // loop_header_branch
                %738 = sbr.rel (%p736) target = $region222
              $region219: #{encoderx4_forward.1} parent=214 // loop_body
                %v742 = vld [vmem:[%s740] sm:%s733]
                %743 = vst [vmem:[%s741] sm:%s733] %v742
                %v744 = vld [vmem:[%s740 + $0x8] sm:%s733]
                %745 = vst [vmem:[%s741 + $0x20] sm:%s733] %v744
                %v746 = vld [vmem:[%s740 + $0x10] sm:%s733]
                %747 = vst [vmem:[%s741 + $0x40] sm:%s733] %v746
                %v748 = vld [vmem:[%s740 + $0x18] sm:%s733]
                %749 = vst [vmem:[%s741 + $0x60] sm:%s733] %v748
              $region220: #{encoderx4_forward.1} parent=214 // loop_footer
                %s739 = sadd.s32 1, %s735
              $region221: #{encoderx4_forward.1} parent=214 // loop_footer_branch
                %734 = sbr.rel target = $region217
              $region222: #{encoderx4_forward.1} parent=214 // loop_exit
                _
            $region215: #{encoderx4_forward.1} parent=206 // pred_fallthru
              _
          $region207: #{encoderx4_forward.1} parent=202 // pred_fallthru
            _
          %770 = vnop
        $region203: #{encoderx4_forward.1} parent=182 // pred_fallthru
          _
      $region183: #{encoderx4_forward.1} parent=5 // pred_fallthru
        _
      %p771 = scmp.le.s32.totalorder 2, %s12
      // Predicated region
      $region238: #{encoderx4_forward.1} parent=5 // pred_check
        %p772 = pneg %p771
      $region239: #{encoderx4_forward.1} parent=5 // pred_check_branch
        %774 = sbr.rel (%p772) target = $region241
      $region240: #{encoderx4_forward.1} parent=5 // pred_region
        %s775 = ssub.s32 %s12, 2
        // Predicated region
        $region242: #{encoderx4_forward.1} parent=240 // pred_check
          %p776 = pneg %p187
        $region243: #{encoderx4_forward.1} parent=240 // pred_check_branch
          %778 = sbr.rel (%p776) target = $region245
        $region244: #{encoderx4_forward.1} parent=240 // pred_region
          %s779 = sand.u32 %s172, 1
          %s780 = sand.u32 %s172, 1
          %s781 = smul.addr %s780, 32
          %s782 = scalar_lea.vmem [#allocation6], %s781
        $region245: #{encoderx4_forward.1} parent=240 // pred_fallthru
          _
      $region241: #{encoderx4_forward.1} parent=5 // pred_fallthru
        _
    $region6: #{encoderx4_forward.1} parent=1 // loop_footer
      %s16 = sadd.s32 1, %s12
    $region7: #{encoderx4_forward.1} parent=1 // loop_footer_branch
      %11 = sbr.rel target = $region3
    $region8: #{encoderx4_forward.1} parent=1 // loop_exit
      _

</llo_original>
